<compile_context>
chip_gen: v6e
topology: v6e:2x2x1
jax: 0.10.0
libtpu: 0.0.40
codegen_flags: <defaults>
</compile_context>

<pallas_src>
import functools

import jax
import jax.numpy as jnp
from jax.experimental import pallas as pl
from jax.experimental.pallas import tpu as pltpu

D_IN = 512
H1 = 256
H2 = 52
D_OUT = 4

H2_PAD = 128   # 52 padded up to a full lane width
OUT_PAD = 128  # 4 padded up to a full lane width


def _round_up(n, m):
    return ((n + m - 1) // m) * m


def mlp_kernel(x_ref, w1_ref, b1_ref, w2_ref, b2_ref, w3_ref, b3_ref, o_ref):
    # Layer 1: (bm, 512) @ (512, 256) + (1, 256), ReLU  (f32 accumulation)
    h = jnp.dot(x_ref[...], w1_ref[...], preferred_element_type=jnp.float32)
    h = jnp.maximum(h + b1_ref[...], 0.0)
    # Layer 2: (bm, 256) @ (256, 128) + (1, 128), ReLU  (cols 52..127 are zero)
    h = h.astype(w2_ref.dtype)
    h = jnp.dot(h, w2_ref[...], preferred_element_type=jnp.float32)
    h = jnp.maximum(h + b2_ref[...], 0.0)
    # Layer 3: (bm, 128) @ (128, 128) + (1, 128), ReLU  (cols 4..127 are zero)
    h = h.astype(w3_ref.dtype)
    h = jnp.dot(h, w3_ref[...], preferred_element_type=jnp.float32)
    h = jnp.maximum(h + b3_ref[...], 0.0)
    o_ref[...] = h.astype(o_ref.dtype)


def mlp_forward(x, params, *, bm=1024, compute_dtype=None):
    """Fused 3-layer MLP forward.

    bm: batch tile (rows per grid step). Clamped to the (padded) batch for
        small inputs; large batches stream in bm-row tiles.
    compute_dtype: e.g. jnp.bfloat16 to halve HBM traffic for x/weights on
        v6e/v7x (accumulation and bias/ReLU epilogue stay in f32).
    """
    (w1, b1), (w2, b2), (w3, b3) = params
    B = x.shape[0]
    assert x.shape[1] == D_IN

    # ---- Pad the narrow dims to lane-dense widths (numerically a no-op). ----
    w2p = jnp.pad(w2, ((0, 0), (0, H2_PAD - H2)))
    b2p = jnp.pad(b2, ((0, 0), (0, H2_PAD - H2)))
    w3p = jnp.pad(w3, ((0, H2_PAD - H2), (0, OUT_PAD - D_OUT)))
    b3p = jnp.pad(b3, ((0, 0), (0, OUT_PAD - D_OUT)))
    w1p, b1p = w1, b1

    # ---- Batch tiling: pad B up to a multiple of the effective tile. ----
    bm_eff = max(8, min(bm, _round_up(B, 8)))
    bm_eff = _round_up(bm_eff, 8)
    B_pad = _round_up(B, bm_eff)
    if B_pad != B:
        x = jnp.pad(x, ((0, B_pad - B), (0, 0)))
    grid = (B_pad // bm_eff,)

    # ---- Optional reduced-precision compute (keeps f32 accumulation). ----
    if compute_dtype is not None:
        x = x.astype(compute_dtype)
        w1p = w1p.astype(compute_dtype)
        w2p = w2p.astype(compute_dtype)
        w3p = w3p.astype(compute_dtype)

    def full(arr):
        shape = arr.shape
        return pl.BlockSpec(shape, lambda i: tuple(0 for _ in shape))

    grid_spec = pltpu.PrefetchScalarGridSpec(
        num_scalar_prefetch=0,
        grid=grid,
        in_specs=[
            pl.BlockSpec((bm_eff, D_IN), lambda i: (i, 0)),
            full(w1p), full(b1p),
            full(w2p), full(b2p),
            full(w3p), full(b3p),
        ],
        out_specs=pl.BlockSpec((bm_eff, OUT_PAD), lambda i: (i, 0)),
    )

    itemsize = jnp.dtype(x.dtype).itemsize
    weight_bytes = sum(
        a.size * jnp.dtype(a.dtype).itemsize
        for a in (w1p, b1p, w2p, b2p, w3p, b3p)
    )
    cost = pl.CostEstimate(
        flops=2 * B_pad * (D_IN * H1 + H1 * H2_PAD + H2_PAD * OUT_PAD),
        transcendentals=0,
        bytes_accessed=B_pad * D_IN * itemsize + weight_bytes + B_pad * OUT_PAD * 4,
    )

    out = pl.pallas_call(
        mlp_kernel,
        out_shape=jax.ShapeDtypeStruct((B_pad, OUT_PAD), jnp.float32),
        grid_spec=grid_spec,
        compiler_params=pltpu.CompilerParams(
            dimension_semantics=("parallel",),
            vmem_limit_bytes=32 * 1024 * 1024,  # well within v7x's 64 MiB VMEM
        ),
        cost_estimate=cost,
    )(x, w1p, b1p, w2p, b2p, w3p, b3p)

    return out[:B, :D_OUT]


def init_params(key):
    """Deterministic PyTorch-style (Kaiming-uniform-ish) init: U(-1/sqrt(fan_in), +)."""
    dims = [(D_IN, H1), (H1, H2), (H2, D_OUT)]
    params = []
    for (fan_in, fan_out) in dims:
        key, kw, kb = jax.random.split(key, 3)
        bound = 1.0 / (fan_in ** 0.5)
        w = jax.random.uniform(kw, (fan_in, fan_out), jnp.float32, -bound, bound)
        b = jax.random.uniform(kb, (1, fan_out), jnp.float32, -bound, bound)
        params.append((w, b))
    return params


def mlp_reference(x, params):
    h = x
    for (w, b) in params:
        h = jnp.maximum(jnp.dot(h, w) + b, 0.0)
    return h


if __name__ == "__main__":
    key = jax.random.PRNGKey(0)
    kp, kx = jax.random.split(key)
    params = init_params(kp)

    # Small validation batch (exercises the bm clamp + padding path).
    B = 8
    x = jax.random.normal(kx, (B, D_IN), jnp.float32)

    out = mlp_forward(x, params)
    out = jax.block_until_ready(out)

    ref = mlp_reference(x, params)
    assert out.shape == (B, D_OUT)
    assert jnp.allclose(out, ref, atol=1e-5, rtol=1e-5)

    # Larger batch with a non-divisible size to exercise tiling + tail padding.
    B2 = 1000
    x2 = jax.random.normal(kx, (B2, D_IN), jnp.float32)
    out2 = jax.block_until_ready(mlp_forward(x2, params, bm=512))
    ref2 = mlp_reference(x2, params)
    assert out2.shape == (B2, D_OUT)
    assert jnp.allclose(out2, ref2, atol=1e-5, rtol=1e-5)

    print("KERNEL_OK")
</pallas_src>

<mosaic_0001>
module attributes {stable_mosaic.version = 11 : i64} {
  func.func @mlp_kernel(%arg0: i32, %arg1: memref<8x512xf32, #tpu.memory_space<vmem>>, %arg2: memref<512x256xf32, #tpu.memory_space<vmem>>, %arg3: memref<1x256xf32, #tpu.memory_space<vmem>>, %arg4: memref<256x128xf32, #tpu.memory_space<vmem>>, %arg5: memref<1x128xf32, #tpu.memory_space<vmem>>, %arg6: memref<128x128xf32, #tpu.memory_space<vmem>>, %arg7: memref<1x128xf32, #tpu.memory_space<vmem>>, %arg8: memref<8x128xf32, #tpu.memory_space<vmem>>) attributes {dimension_semantics = [#tpu.dimension_semantics<parallel>], iteration_bounds = array<i64: 1>, scalar_prefetch = 0 : i64, scratch_operands = 0 : i64, tpu.core_type = #tpu.core_type<tc>, window_params = [{transform_indices = @transform_0, window_bounds = array<i64: 8, 512>}, {pipeline_mode = #tpu.pipeline_mode<synchronous>, transform_indices = @transform_1, window_bounds = array<i64: 512, 256>}, {pipeline_mode = #tpu.pipeline_mode<synchronous>, transform_indices = @transform_2, window_bounds = array<i64: 1, 256>}, {pipeline_mode = #tpu.pipeline_mode<synchronous>, transform_indices = @transform_3, window_bounds = array<i64: 256, 128>}, {pipeline_mode = #tpu.pipeline_mode<synchronous>, transform_indices = @transform_4, window_bounds = array<i64: 1, 128>}, {pipeline_mode = #tpu.pipeline_mode<synchronous>, transform_indices = @transform_5, window_bounds = array<i64: 128, 128>}, {pipeline_mode = #tpu.pipeline_mode<synchronous>, transform_indices = @transform_6, window_bounds = array<i64: 1, 128>}, {transform_indices = @transform_7, window_bounds = array<i64: 8, 128>}]} {
    %c0 = arith.constant 0 : index
    %c0_0 = arith.constant 0 : index
    %0 = vector.load %arg1[%c0, %c0_0] : memref<8x512xf32, #tpu.memory_space<vmem>>, vector<8x512xf32>
    %c0_1 = arith.constant 0 : index
    %c0_2 = arith.constant 0 : index
    %1 = vector.load %arg2[%c0_1, %c0_2] : memref<512x256xf32, #tpu.memory_space<vmem>>, vector<512x256xf32>
    %cst = arith.constant dense<0.000000e+00> : vector<8x256xf32>
    %2 = tpu.matmul %0, %1, %cst {dimension_numbers = #tpu.dot_dimension_numbers<[1], [0], [0], [1], [0, 0, 1, 1], [], []>} : vector<8x512xf32>, vector<512x256xf32>, vector<8x256xf32> -> vector<8x256xf32>
    %c0_3 = arith.constant 0 : index
    %c0_4 = arith.constant 0 : index
    %3 = vector.load %arg3[%c0_3, %c0_4] : memref<1x256xf32, #tpu.memory_space<vmem>>, vector<1x256xf32>
    %4 = vector.broadcast %3 : vector<1x256xf32> to vector<8x256xf32>
    %5 = arith.addf %2, %4 : vector<8x256xf32>
    %cst_5 = arith.constant 0.000000e+00 : f32
    %6 = vector.broadcast %cst_5 : f32 to vector<8x256xf32>
    %7 = arith.maximumf %5, %6 : vector<8x256xf32>
    %c0_6 = arith.constant 0 : index
    %c0_7 = arith.constant 0 : index
    %8 = vector.load %arg4[%c0_6, %c0_7] : memref<256x128xf32, #tpu.memory_space<vmem>>, vector<256x128xf32>
    %cst_8 = arith.constant dense<0.000000e+00> : vector<8x128xf32>
    %9 = tpu.matmul %7, %8, %cst_8 {dimension_numbers = #tpu.dot_dimension_numbers<[1], [0], [0], [1], [0, 0, 1, 1], [], []>} : vector<8x256xf32>, vector<256x128xf32>, vector<8x128xf32> -> vector<8x128xf32>
    %c0_9 = arith.constant 0 : index
    %c0_10 = arith.constant 0 : index
    %10 = vector.load %arg5[%c0_9, %c0_10] : memref<1x128xf32, #tpu.memory_space<vmem>>, vector<1x128xf32>
    %11 = vector.broadcast %10 : vector<1x128xf32> to vector<8x128xf32>
    %12 = arith.addf %9, %11 : vector<8x128xf32>
    %cst_11 = arith.constant 0.000000e+00 : f32
    %13 = vector.broadcast %cst_11 : f32 to vector<8x128xf32>
    %14 = arith.maximumf %12, %13 : vector<8x128xf32>
    %c0_12 = arith.constant 0 : index
    %c0_13 = arith.constant 0 : index
    %15 = vector.load %arg6[%c0_12, %c0_13] : memref<128x128xf32, #tpu.memory_space<vmem>>, vector<128x128xf32>
    %cst_14 = arith.constant dense<0.000000e+00> : vector<8x128xf32>
    %16 = tpu.matmul %14, %15, %cst_14 {dimension_numbers = #tpu.dot_dimension_numbers<[1], [0], [0], [1], [0, 0, 1, 1], [], []>} : vector<8x128xf32>, vector<128x128xf32>, vector<8x128xf32> -> vector<8x128xf32>
    %c0_15 = arith.constant 0 : index
    %c0_16 = arith.constant 0 : index
    %17 = vector.load %arg7[%c0_15, %c0_16] : memref<1x128xf32, #tpu.memory_space<vmem>>, vector<1x128xf32>
    %18 = vector.broadcast %17 : vector<1x128xf32> to vector<8x128xf32>
    %19 = arith.addf %16, %18 : vector<8x128xf32>
    %cst_17 = arith.constant 0.000000e+00 : f32
    %20 = vector.broadcast %cst_17 : f32 to vector<8x128xf32>
    %21 = arith.maximumf %19, %20 : vector<8x128xf32>
    %c0_18 = arith.constant 0 : index
    %c0_19 = arith.constant 0 : index
    %22 = vector.load %arg8[%c0_18, %c0_19] : memref<8x128xf32, #tpu.memory_space<vmem>>, vector<8x128xf32>
    tpu.vector_store %arg8[%c0_18, %c0_19], %21 {strides = array<i32>} : memref<8x128xf32, #tpu.memory_space<vmem>>, vector<8x128xf32>,
    return
  }
  func.func @transform_0(%arg0: i32) -> (i32, i32) {
    %c0_i32 = arith.constant 0 : i32
    %c0_i32_0 = arith.constant 0 : i32
    return %arg0, %c0_i32 : i32, i32
  }
  func.func @transform_1(%arg0: i32) -> (i32, i32) {
    %c0_i32 = arith.constant 0 : i32
    %c0_i32_0 = arith.constant 0 : i32
    %c0_i32_1 = arith.constant 0 : i32
    return %c0_i32, %c0_i32_0 : i32, i32
  }
  func.func @transform_2(%arg0: i32) -> (i32, i32) {
    %c0_i32 = arith.constant 0 : i32
    %c0_i32_0 = arith.constant 0 : i32
    %c0_i32_1 = arith.constant 0 : i32
    return %c0_i32, %c0_i32_0 : i32, i32
  }
  func.func @transform_3(%arg0: i32) -> (i32, i32) {
    %c0_i32 = arith.constant 0 : i32
    %c0_i32_0 = arith.constant 0 : i32
    %c0_i32_1 = arith.constant 0 : i32
    return %c0_i32, %c0_i32_0 : i32, i32
  }
  func.func @transform_4(%arg0: i32) -> (i32, i32) {
    %c0_i32 = arith.constant 0 : i32
    %c0_i32_0 = arith.constant 0 : i32
    %c0_i32_1 = arith.constant 0 : i32
    return %c0_i32, %c0_i32_0 : i32, i32
  }
  func.func @transform_5(%arg0: i32) -> (i32, i32) {
    %c0_i32 = arith.constant 0 : i32
    %c0_i32_0 = arith.constant 0 : i32
    %c0_i32_1 = arith.constant 0 : i32
    return %c0_i32, %c0_i32_0 : i32, i32
  }
  func.func @transform_6(%arg0: i32) -> (i32, i32) {
    %c0_i32 = arith.constant 0 : i32
    %c0_i32_0 = arith.constant 0 : i32
    %c0_i32_1 = arith.constant 0 : i32
    return %c0_i32, %c0_i32_0 : i32, i32
  }
  func.func @transform_7(%arg0: i32) -> (i32, i32) {
    %c0_i32 = arith.constant 0 : i32
    %c0_i32_0 = arith.constant 0 : i32
    return %arg0, %c0_i32 : i32, i32
  }
}

</mosaic_0001>

<llo_original>
// kernel: tpu_custom_call.1
$region0: #{tpu_custom_call.1}
  #allocation0 [shape = 'u32[]', space=smem, size = 0x4, offset = 0x4, fixed_abs, tag = 'smem constant byte address 0x4 - core index']
  #allocation1 [shape = 'u32[144,128]{1,0:T(1,128)}', space=vmem, size = 0x12000, scoped, tag = 'internal scratch']
  %s0 = inlined_call_operand.hbm [shape: f32[8,512], index: 0, kind: input, shape index: {}]
  %s1 = inlined_call_operand.hbm [shape: f32[512,256], index: 1, kind: input, shape index: {}]
  %s2 = inlined_call_operand.vmem [shape: f32[1,256], index: 2, kind: input, shape index: {}]
  %s3 = inlined_call_operand.hbm [shape: f32[256,128], index: 3, kind: input, shape index: {}]
  %s4 = inlined_call_operand.vmem [shape: f32[1,128], index: 4, kind: input, shape index: {}]
  %s5 = inlined_call_operand.hbm [shape: f32[128,128], index: 5, kind: input, shape index: {}]
  %s6 = inlined_call_operand.vmem [shape: f32[1,128], index: 6, kind: input, shape index: {}]
  %s7 = inlined_call_operand.hbm [shape: f32[8,128], index: 7, kind: output, shape index: {}]
  %s8 = sld [smem:[#allocation0]]
  $region54: #{tpu_custom_call.1} parent=0
    _
  %s10 = ssub.s32 1, %s8
  %s11 = scalar_select 0, %s10, %s8
  $region1: #{tpu_custom_call.1} parent=0
    #allocation2 [shape = 'u8[16384]{0}', space=vmem, size = 0x4000, scoped, tag = 'input window, operand 0, single buffered']
    #allocation3 [shape = 's32[1]{0}', space=sflag, size = 0x4, scoped, tag = 'scoped memory for tpu_custom_call.1']
    #allocation4 [shape = 's32[1]{0}', space=sflag, size = 0x4, scoped, tag = 'scoped memory for tpu_custom_call.1']
    #allocation5 [shape = 'u8[524288]{0}', space=vmem, size = 0x80000, scoped, tag = 'input window, operand 1, single buffered']
    #allocation6 [shape = 's32[1]{0}', space=sflag, size = 0x4, scoped, tag = 'scoped memory for tpu_custom_call.1']
    #allocation7 [shape = 'u8[131072]{0}', space=vmem, size = 0x20000, scoped, tag = 'input window, operand 3, single buffered']
    #allocation8 [shape = 'u8[65536]{0}', space=vmem, size = 0x10000, scoped, tag = 'input window, operand 5, single buffered']
    #allocation9 [shape = 's32[1]{0}', space=sflag, size = 0x4, scoped, tag = 'scoped memory for tpu_custom_call.1']
    #allocation10 [shape = 'u8[4096]{0}', space=vmem, size = 0x1000, scoped, tag = 'output window, operand 0, single buffered']
    %12 = vsyncpa [#allocation3], 0
    %13 = vsyncpa [#allocation6], 0
    %14 = vsyncpa [#allocation9], 0
    %15 = vsyncpa [#allocation4], 0
    // Predicated region
    $region2: #{tpu_custom_call.1} parent=1 // pred_check
      _
    $region3: #{tpu_custom_call.1} parent=1 // pred_check_branch
      %17 = sbr.rel (0) target = $region5
    $region4: #{tpu_custom_call.1} parent=1 // pred_region
      %s19 = ssub.s32 512, 512
      %20 = vsyncadd [#allocation3], %s19
      %s22 = sshll.u32 [#allocation2], 4
      %s23 = int_to_ptr.vmem [resolvable:$true] %s22
      %25 = dma.hbm_to_vmem [thread:$0]  %s0, 512, %s23, [#allocation3]
    $region5: #{tpu_custom_call.1} parent=1 // pred_fallthru
      _
    // Predicated region
    $region6: #{tpu_custom_call.1} parent=1 // pred_check
      _
    $region7: #{tpu_custom_call.1} parent=1 // pred_check_branch
      %27 = sbr.rel (0) target = $region9
    $region8: #{tpu_custom_call.1} parent=1 // pred_region
      %s29 = ssub.s32 16384, 16384
      %30 = vsyncadd [#allocation6], %s29
      %s31 = sshll.u32 [#allocation5], 4
      %s32 = int_to_ptr.vmem [resolvable:$true] %s31
      %37 = dma.hbm_to_vmem [thread:$0]  %s1, 16384, %s32, [#allocation6], 256, 256, 16
    $region9: #{tpu_custom_call.1} parent=1 // pred_fallthru
      _
    // Predicated region
    $region10: #{tpu_custom_call.1} parent=1 // pred_check
      _
    $region11: #{tpu_custom_call.1} parent=1 // pred_check_branch
      %39 = sbr.rel (0) target = $region13
    $region12: #{tpu_custom_call.1} parent=1 // pred_region
      _
    $region13: #{tpu_custom_call.1} parent=1 // pred_fallthru
      _
    // Predicated region
    $region14: #{tpu_custom_call.1} parent=1 // pred_check
      _
    $region15: #{tpu_custom_call.1} parent=1 // pred_check_branch
      %41 = sbr.rel (0) target = $region17
    $region16: #{tpu_custom_call.1} parent=1 // pred_region
      %s43 = ssub.s32 4096, 4096
      %44 = vsyncadd [#allocation6], %s43
      %s45 = sshll.u32 [#allocation7], 4
      %s46 = int_to_ptr.vmem [resolvable:$true] %s45
      %51 = dma.hbm_to_vmem [thread:$0]  %s3, 4096, %s46, [#allocation6], 128, 128, 8
    $region17: #{tpu_custom_call.1} parent=1 // pred_fallthru
      _
    // Predicated region
    $region18: #{tpu_custom_call.1} parent=1 // pred_check
      _
    $region19: #{tpu_custom_call.1} parent=1 // pred_check_branch
      %53 = sbr.rel (0) target = $region21
    $region20: #{tpu_custom_call.1} parent=1 // pred_region
      _
    $region21: #{tpu_custom_call.1} parent=1 // pred_fallthru
      _
    // Predicated region
    $region22: #{tpu_custom_call.1} parent=1 // pred_check
      _
    $region23: #{tpu_custom_call.1} parent=1 // pred_check_branch
      %55 = sbr.rel (0) target = $region25
    $region24: #{tpu_custom_call.1} parent=1 // pred_region
      %s57 = ssub.s32 2048, 2048
      %58 = vsyncadd [#allocation9], %s57
      %s59 = sshll.u32 [#allocation8], 4
      %s60 = int_to_ptr.vmem [resolvable:$true] %s59
      %65 = dma.hbm_to_vmem [thread:$0]  %s5, 2048, %s60, [#allocation9], 128, 128, 8
    $region25: #{tpu_custom_call.1} parent=1 // pred_fallthru
      _
    // Predicated region
    $region26: #{tpu_custom_call.1} parent=1 // pred_check
      _
    $region27: #{tpu_custom_call.1} parent=1 // pred_check_branch
      %67 = sbr.rel (0) target = $region29
    $region28: #{tpu_custom_call.1} parent=1 // pred_region
      _
    $region29: #{tpu_custom_call.1} parent=1 // pred_fallthru
      _
    // Predicated region
    $region30: #{tpu_custom_call.1} parent=1 // pred_check
      _
    $region31: #{tpu_custom_call.1} parent=1 // pred_check_branch
      %69 = sbr.rel (0) target = $region33
    $region32: #{tpu_custom_call.1} parent=1 // pred_region
      %70 = dma.done [#allocation3], 512
    $region33: #{tpu_custom_call.1} parent=1 // pred_fallthru
      _
    // Predicated region
    $region34: #{tpu_custom_call.1} parent=1 // pred_check
      _
    $region35: #{tpu_custom_call.1} parent=1 // pred_check_branch
      %72 = sbr.rel (0) target = $region37
    $region36: #{tpu_custom_call.1} parent=1 // pred_region
      %73 = dma.done [#allocation6], 16384
    $region37: #{tpu_custom_call.1} parent=1 // pred_fallthru
      _
    // Predicated region
    $region38: #{tpu_custom_call.1} parent=1 // pred_check
      _
    $region39: #{tpu_custom_call.1} parent=1 // pred_check_branch
      %75 = sbr.rel (0) target = $region41
    $region40: #{tpu_custom_call.1} parent=1 // pred_region
      %76 = dma.done [#allocation6], 4096
    $region41: #{tpu_custom_call.1} parent=1 // pred_fallthru
      _
    // Predicated region
    $region42: #{tpu_custom_call.1} parent=1 // pred_check
      _
    $region43: #{tpu_custom_call.1} parent=1 // pred_check_branch
      %78 = sbr.rel (0) target = $region45
    $region44: #{tpu_custom_call.1} parent=1 // pred_region
      %79 = dma.done [#allocation9], 2048
    $region45: #{tpu_custom_call.1} parent=1 // pred_fallthru
      _
    %v80 = vld [vmem:[#allocation2] sm:$0xff]
    %v81 = vld [vmem:[#allocation2 + $0x8] sm:$0xff]
    %v82 = vld [vmem:[#allocation2 + $0x10] sm:$0xff]
    %v83 = vld [vmem:[#allocation2 + $0x18] sm:$0xff]
    %v84 = vld [vmem:[#allocation5] sm:$0xff]
    %v85 = vld [vmem:[#allocation5 + $0x8] sm:$0xff]
    %v86 = vld [vmem:[#allocation5 + $0x10] sm:$0xff]
    %v87 = vld [vmem:[#allocation5 + $0x18] sm:$0xff]
    %v88 = vld [vmem:[#allocation5 + $0x20] sm:$0xff]
    %v89 = vld [vmem:[#allocation5 + $0x28] sm:$0xff]
    %v90 = vld [vmem:[#allocation5 + $0x30] sm:$0xff]
    %v91 = vld [vmem:[#allocation5 + $0x38] sm:$0xff]
    %v92 = vld [vmem:[#allocation5 + $0x40] sm:$0xff]
    %v93 = vld [vmem:[#allocation5 + $0x48] sm:$0xff]
    %v94 = vld [vmem:[#allocation5 + $0x50] sm:$0xff]
    %v95 = vld [vmem:[#allocation5 + $0x58] sm:$0xff]
    %v96 = vld [vmem:[#allocation5 + $0x60] sm:$0xff]
    %v97 = vld [vmem:[#allocation5 + $0x68] sm:$0xff]
    %v98 = vld [vmem:[#allocation5 + $0x70] sm:$0xff]
    %v99 = vld [vmem:[#allocation5 + $0x78] sm:$0xff]
    %v100 = vld [vmem:[#allocation5 + $0x80] sm:$0xff]
    %v101 = vld [vmem:[#allocation5 + $0x88] sm:$0xff]
    %v102 = vld [vmem:[#allocation5 + $0x90] sm:$0xff]
    %v103 = vld [vmem:[#allocation5 + $0x98] sm:$0xff]
    %v104 = vld [vmem:[#allocation5 + $0xa0] sm:$0xff]
    %v105 = vld [vmem:[#allocation5 + $0xa8] sm:$0xff]
    %v106 = vld [vmem:[#allocation5 + $0xb0] sm:$0xff]
    %v107 = vld [vmem:[#allocation5 + $0xb8] sm:$0xff]
    %v108 = vld [vmem:[#allocation5 + $0xc0] sm:$0xff]
    %v109 = vld [vmem:[#allocation5 + $0xc8] sm:$0xff]
    %v110 = vld [vmem:[#allocation5 + $0xd0] sm:$0xff]
    %v111 = vld [vmem:[#allocation5 + $0xd8] sm:$0xff]
    %v112 = vld [vmem:[#allocation5 + $0xe0] sm:$0xff]
    %v113 = vld [vmem:[#allocation5 + $0xe8] sm:$0xff]
    %v114 = vld [vmem:[#allocation5 + $0xf0] sm:$0xff]
    %v115 = vld [vmem:[#allocation5 + $0xf8] sm:$0xff]
    %v116 = vld [vmem:[#allocation5 + $0x100] sm:$0xff]
    %v117 = vld [vmem:[#allocation5 + $0x108] sm:$0xff]
    %v118 = vld [vmem:[#allocation5 + $0x110] sm:$0xff]
    %v119 = vld [vmem:[#allocation5 + $0x118] sm:$0xff]
    %v120 = vld [vmem:[#allocation5 + $0x120] sm:$0xff]
    %v121 = vld [vmem:[#allocation5 + $0x128] sm:$0xff]
    %v122 = vld [vmem:[#allocation5 + $0x130] sm:$0xff]
    %v123 = vld [vmem:[#allocation5 + $0x138] sm:$0xff]
    %v124 = vld [vmem:[#allocation5 + $0x140] sm:$0xff]
    %v125 = vld [vmem:[#allocation5 + $0x148] sm:$0xff]
    %v126 = vld [vmem:[#allocation5 + $0x150] sm:$0xff]
    %v127 = vld [vmem:[#allocation5 + $0x158] sm:$0xff]
    %v128 = vld [vmem:[#allocation5 + $0x160] sm:$0xff]
    %v129 = vld [vmem:[#allocation5 + $0x168] sm:$0xff]
    %v130 = vld [vmem:[#allocation5 + $0x170] sm:$0xff]
    %v131 = vld [vmem:[#allocation5 + $0x178] sm:$0xff]
    %v132 = vld [vmem:[#allocation5 + $0x180] sm:$0xff]
    %v133 = vld [vmem:[#allocation5 + $0x188] sm:$0xff]
    %v134 = vld [vmem:[#allocation5 + $0x190] sm:$0xff]
    %v135 = vld [vmem:[#allocation5 + $0x198] sm:$0xff]
    %v136 = vld [vmem:[#allocation5 + $0x1a0] sm:$0xff]
    %v137 = vld [vmem:[#allocation5 + $0x1a8] sm:$0xff]
    %v138 = vld [vmem:[#allocation5 + $0x1b0] sm:$0xff]
    %v139 = vld [vmem:[#allocation5 + $0x1b8] sm:$0xff]
    %v140 = vld [vmem:[#allocation5 + $0x1c0] sm:$0xff]
    %v141 = vld [vmem:[#allocation5 + $0x1c8] sm:$0xff]
    %v142 = vld [vmem:[#allocation5 + $0x1d0] sm:$0xff]
    %v143 = vld [vmem:[#allocation5 + $0x1d8] sm:$0xff]
    %v144 = vld [vmem:[#allocation5 + $0x1e0] sm:$0xff]
    %v145 = vld [vmem:[#allocation5 + $0x1e8] sm:$0xff]
    %v146 = vld [vmem:[#allocation5 + $0x1f0] sm:$0xff]
    %v147 = vld [vmem:[#allocation5 + $0x1f8] sm:$0xff]
    %v148 = vld [vmem:[#allocation5 + $0x200] sm:$0xff]
    %v149 = vld [vmem:[#allocation5 + $0x208] sm:$0xff]
    %v150 = vld [vmem:[#allocation5 + $0x210] sm:$0xff]
    %v151 = vld [vmem:[#allocation5 + $0x218] sm:$0xff]
    %v152 = vld [vmem:[#allocation5 + $0x220] sm:$0xff]
    %v153 = vld [vmem:[#allocation5 + $0x228] sm:$0xff]
    %v154 = vld [vmem:[#allocation5 + $0x230] sm:$0xff]
    %v155 = vld [vmem:[#allocation5 + $0x238] sm:$0xff]
    %v156 = vld [vmem:[#allocation5 + $0x240] sm:$0xff]
    %v157 = vld [vmem:[#allocation5 + $0x248] sm:$0xff]
    %v158 = vld [vmem:[#allocation5 + $0x250] sm:$0xff]
    %v159 = vld [vmem:[#allocation5 + $0x258] sm:$0xff]
    %v160 = vld [vmem:[#allocation5 + $0x260] sm:$0xff]
    %v161 = vld [vmem:[#allocation5 + $0x268] sm:$0xff]
    %v162 = vld [vmem:[#allocation5 + $0x270] sm:$0xff]
    %v163 = vld [vmem:[#allocation5 + $0x278] sm:$0xff]
    %v164 = vld [vmem:[#allocation5 + $0x280] sm:$0xff]
    %v165 = vld [vmem:[#allocation5 + $0x288] sm:$0xff]
    %v166 = vld [vmem:[#allocation5 + $0x290] sm:$0xff]
    %v167 = vld [vmem:[#allocation5 + $0x298] sm:$0xff]
    %v168 = vld [vmem:[#allocation5 + $0x2a0] sm:$0xff]
    %v169 = vld [vmem:[#allocation5 + $0x2a8] sm:$0xff]
    %v170 = vld [vmem:[#allocation5 + $0x2b0] sm:$0xff]
    %v171 = vld [vmem:[#allocation5 + $0x2b8] sm:$0xff]
    %v172 = vld [vmem:[#allocation5 + $0x2c0] sm:$0xff]
    %v173 = vld [vmem:[#allocation5 + $0x2c8] sm:$0xff]
    %v174 = vld [vmem:[#allocation5 + $0x2d0] sm:$0xff]
    %v175 = vld [vmem:[#allocation5 + $0x2d8] sm:$0xff]
    %v176 = vld [vmem:[#allocation5 + $0x2e0] sm:$0xff]
    %v177 = vld [vmem:[#allocation5 + $0x2e8] sm:$0xff]
    %v178 = vld [vmem:[#allocation5 + $0x2f0] sm:$0xff]
    %v179 = vld [vmem:[#allocation5 + $0x2f8] sm:$0xff]
    %v180 = vld [vmem:[#allocation5 + $0x300] sm:$0xff]
    %v181 = vld [vmem:[#allocation5 + $0x308] sm:$0xff]
    %v182 = vld [vmem:[#allocation5 + $0x310] sm:$0xff]
    %v183 = vld [vmem:[#allocation5 + $0x318] sm:$0xff]
    %v184 = vld [vmem:[#allocation5 + $0x320] sm:$0xff]
    %v185 = vld [vmem:[#allocation5 + $0x328] sm:$0xff]
    %v186 = vld [vmem:[#allocation5 + $0x330] sm:$0xff]
    %v187 = vld [vmem:[#allocation5 + $0x338] sm:$0xff]
    %v188 = vld [vmem:[#allocation5 + $0x340] sm:$0xff]
    %v189 = vld [vmem:[#allocation5 + $0x348] sm:$0xff]
    %v190 = vld [vmem:[#allocation5 + $0x350] sm:$0xff]
    %v191 = vld [vmem:[#allocation5 + $0x358] sm:$0xff]
    %v192 = vld [vmem:[#allocation5 + $0x360] sm:$0xff]
    %v193 = vld [vmem:[#allocation5 + $0x368] sm:$0xff]
    %v194 = vld [vmem:[#allocation5 + $0x370] sm:$0xff]
    %v195 = vld [vmem:[#allocation5 + $0x378] sm:$0xff]
    %v196 = vld [vmem:[#allocation5 + $0x380] sm:$0xff]
    %v197 = vld [vmem:[#allocation5 + $0x388] sm:$0xff]
    %v198 = vld [vmem:[#allocation5 + $0x390] sm:$0xff]
    %v199 = vld [vmem:[#allocation5 + $0x398] sm:$0xff]
    %v200 = vld [vmem:[#allocation5 + $0x3a0] sm:$0xff]
    %v201 = vld [vmem:[#allocation5 + $0x3a8] sm:$0xff]
    %v202 = vld [vmem:[#allocation5 + $0x3b0] sm:$0xff]
    %v203 = vld [vmem:[#allocation5 + $0x3b8] sm:$0xff]
    %v204 = vld [vmem:[#allocation5 + $0x3c0] sm:$0xff]
    %v205 = vld [vmem:[#allocation5 + $0x3c8] sm:$0xff]
    %v206 = vld [vmem:[#allocation5 + $0x3d0] sm:$0xff]
    %v207 = vld [vmem:[#allocation5 + $0x3d8] sm:$0xff]
    %v208 = vld [vmem:[#allocation5 + $0x3e0] sm:$0xff]
    %v209 = vld [vmem:[#allocation5 + $0x3e8] sm:$0xff]
    %v210 = vld [vmem:[#allocation5 + $0x3f0] sm:$0xff]
    %v211 = vld [vmem:[#allocation5 + $0x3f8] sm:$0xff]
    %v212 = vld [vmem:[%s2] sm:$0x3]
    %v214 = vlaneseq
    %v215 = vshrl.u32 %v214, 7
    %v216 = vsub.s32 0, %v215
    %v217 = vrot.slane %v212, %v216
    %v218 = vlaneseq
    %v219 = vshrl.u32 %v218, 7
    %v220 = vsub.s32 1, %v219
    %v221 = vrot.slane %v212, %v220
    %224 = vmatprep.subr.mxu0 %v115
    %225 = vmatpush1.msra.mxu0 %v114
    %226 = vmatprep.subr.mxu0 %v113
    %227 = vmatpush1.msra.mxu0 %v112
    %228 = vmatprep.subr.mxu0 %v111
    %229 = vmatpush1.msra.mxu0 %v110
    %230 = vmatprep.subr.mxu0 %v109
    %231 = vmatpush1.msra.mxu0 %v108
    %232 = vmatprep.subr.mxu0 %v107
    %233 = vmatpush1.msra.mxu0 %v106
    %234 = vmatprep.subr.mxu0 %v105
    %235 = vmatpush1.msra.mxu0 %v104
    %236 = vmatprep.subr.mxu0 %v103
    %237 = vmatpush1.msra.mxu0 %v102
    %238 = vmatprep.subr.mxu0 %v101
    %239 = vmatpush1.msra.mxu0 %v100
    %240 = vmatprep.subr.mxu0 %v99
    %241 = vmatpush1.msra.mxu0 %v98
    %242 = vmatprep.subr.mxu0 %v97
    %243 = vmatpush1.msra.mxu0 %v96
    %244 = vmatprep.subr.mxu0 %v95
    %245 = vmatpush1.msra.mxu0 %v94
    %246 = vmatprep.subr.mxu0 %v93
    %247 = vmatpush1.msra.mxu0 %v92
    %248 = vmatprep.subr.mxu0 %v91
    %249 = vmatpush1.msra.mxu0 %v90
    %250 = vmatprep.subr.mxu0 %v89
    %251 = vmatpush1.msra.mxu0 %v88
    %252 = vmatprep.subr.mxu0 %v87
    %253 = vmatpush1.msra.mxu0 %v86
    %254 = vmatprep.subr.mxu0 %v85
    %255 = vmatpush1.msra.mxu0 %v84
    %256 = vmatprep.subr.mxu0 %v147
    %257 = vmatpush2.msra.mxu0 %v146
    %258 = vmatprep.subr.mxu0 %v145
    %259 = vmatpush2.msra.mxu0 %v144
    %260 = vmatprep.subr.mxu0 %v143
    %261 = vmatpush2.msra.mxu0 %v142
    %262 = vmatprep.subr.mxu0 %v141
    %263 = vmatpush2.msra.mxu0 %v140
    %264 = vmatprep.subr.mxu0 %v139
    %265 = vmatpush2.msra.mxu0 %v138
    %266 = vmatprep.subr.mxu0 %v137
    %267 = vmatpush2.msra.mxu0 %v136
    %268 = vmatprep.subr.mxu0 %v135
    %269 = vmatpush2.msra.mxu0 %v134
    %270 = vmatprep.subr.mxu0 %v133
    %271 = vmatpush2.msra.mxu0 %v132
    %272 = vmatprep.subr.mxu0 %v131
    %273 = vmatpush2.msra.mxu0 %v130
    %274 = vmatprep.subr.mxu0 %v129
    %275 = vmatpush2.msra.mxu0 %v128
    %276 = vmatprep.subr.mxu0 %v127
    %277 = vmatpush2.msra.mxu0 %v126
    %278 = vmatprep.subr.mxu0 %v125
    %279 = vmatpush2.msra.mxu0 %v124
    %280 = vmatprep.subr.mxu0 %v123
    %281 = vmatpush2.msra.mxu0 %v122
    %282 = vmatprep.subr.mxu0 %v121
    %283 = vmatpush2.msra.mxu0 %v120
    %284 = vmatprep.subr.mxu0 %v119
    %285 = vmatpush2.msra.mxu0 %v118
    %286 = vmatprep.subr.mxu0 %v117
    %287 = vmatpush2.msra.mxu0 %v116
    %288 = vmatprep.mubr.f32.mxu0 %v81
    %289 = vmatmul.mubr.f32.gmra.mxu0 %v80
    %v290 = vpop.f32.mrf.mxu0
    %v291 = vadd.f32 %v217, %v290
    %v292 = vpop.f32.mrf.mxu0
    %v293 = vadd.f32 %v221, %v292
    %294 = vdwg.mxu0
    %295 = vmatprep.subr.mxu0 %v179
    %296 = vmatpush1.msra.mxu0 %v178
    %297 = vmatprep.subr.mxu0 %v177
    %298 = vmatpush1.msra.mxu0 %v176
    %299 = vmatprep.subr.mxu0 %v175
    %300 = vmatpush1.msra.mxu0 %v174
    %301 = vmatprep.subr.mxu0 %v173
    %302 = vmatpush1.msra.mxu0 %v172
    %303 = vmatprep.subr.mxu0 %v171
    %304 = vmatpush1.msra.mxu0 %v170
    %305 = vmatprep.subr.mxu0 %v169
    %306 = vmatpush1.msra.mxu0 %v168
    %307 = vmatprep.subr.mxu0 %v167
    %308 = vmatpush1.msra.mxu0 %v166
    %309 = vmatprep.subr.mxu0 %v165
    %310 = vmatpush1.msra.mxu0 %v164
    %311 = vmatprep.subr.mxu0 %v163
    %312 = vmatpush1.msra.mxu0 %v162
    %313 = vmatprep.subr.mxu0 %v161
    %314 = vmatpush1.msra.mxu0 %v160
    %315 = vmatprep.subr.mxu0 %v159
    %316 = vmatpush1.msra.mxu0 %v158
    %317 = vmatprep.subr.mxu0 %v157
    %318 = vmatpush1.msra.mxu0 %v156
    %319 = vmatprep.subr.mxu0 %v155
    %320 = vmatpush1.msra.mxu0 %v154
    %321 = vmatprep.subr.mxu0 %v153
    %322 = vmatpush1.msra.mxu0 %v152
    %323 = vmatprep.subr.mxu0 %v151
    %324 = vmatpush1.msra.mxu0 %v150
    %325 = vmatprep.subr.mxu0 %v149
    %326 = vmatpush1.msra.mxu0 %v148
    %327 = vmatprep.subr.mxu0 %v211
    %328 = vmatpush2.msra.mxu0 %v210
    %329 = vmatprep.subr.mxu0 %v209
    %330 = vmatpush2.msra.mxu0 %v208
    %331 = vmatprep.subr.mxu0 %v207
    %332 = vmatpush2.msra.mxu0 %v206
    %333 = vmatprep.subr.mxu0 %v205
    %334 = vmatpush2.msra.mxu0 %v204
    %335 = vmatprep.subr.mxu0 %v203
    %336 = vmatpush2.msra.mxu0 %v202
    %337 = vmatprep.subr.mxu0 %v201
    %338 = vmatpush2.msra.mxu0 %v200
    %339 = vmatprep.subr.mxu0 %v199
    %340 = vmatpush2.msra.mxu0 %v198
    %341 = vmatprep.subr.mxu0 %v197
    %342 = vmatpush2.msra.mxu0 %v196
    %343 = vmatprep.subr.mxu0 %v195
    %344 = vmatpush2.msra.mxu0 %v194
    %345 = vmatprep.subr.mxu0 %v193
    %346 = vmatpush2.msra.mxu0 %v192
    %347 = vmatprep.subr.mxu0 %v191
    %348 = vmatpush2.msra.mxu0 %v190
    %349 = vmatprep.subr.mxu0 %v189
    %350 = vmatpush2.msra.mxu0 %v188
    %351 = vmatprep.subr.mxu0 %v187
    %352 = vmatpush2.msra.mxu0 %v186
    %353 = vmatprep.subr.mxu0 %v185
    %354 = vmatpush2.msra.mxu0 %v184
    %355 = vmatprep.subr.mxu0 %v183
    %356 = vmatpush2.msra.mxu0 %v182
    %357 = vmatprep.subr.mxu0 %v181
    %358 = vmatpush2.msra.mxu0 %v180
    %359 = vmatprep.mubr.f32.mxu0 %v83
    %360 = vmatmul.mubr.f32.gmra.mxu0 %v82
    %v361 = vpop.f32.mrf.mxu0
    %v362 = vadd.f32 %v291, %v361
    %v363 = vpop.f32.mrf.mxu0
    %v364 = vadd.f32 %v293, %v363
    %365 = vdwg.mxu0
    %v366 = vmax.f32 %v362, 0.0
    %v367 = vmax.f32 %v364, 0.0
    %v368 = vld [vmem:[#allocation7] sm:$0xff]
    %v369 = vld [vmem:[#allocation7 + $0x8] sm:$0xff]
    %v370 = vld [vmem:[#allocation7 + $0x10] sm:$0xff]
    %v371 = vld [vmem:[#allocation7 + $0x18] sm:$0xff]
    %v372 = vld [vmem:[#allocation7 + $0x20] sm:$0xff]
    %v373 = vld [vmem:[#allocation7 + $0x28] sm:$0xff]
    %v374 = vld [vmem:[#allocation7 + $0x30] sm:$0xff]
    %v375 = vld [vmem:[#allocation7 + $0x38] sm:$0xff]
    %v376 = vld [vmem:[#allocation7 + $0x40] sm:$0xff]
    %v377 = vld [vmem:[#allocation7 + $0x48] sm:$0xff]
    %v378 = vld [vmem:[#allocation7 + $0x50] sm:$0xff]
    %v379 = vld [vmem:[#allocation7 + $0x58] sm:$0xff]
    %v380 = vld [vmem:[#allocation7 + $0x60] sm:$0xff]
    %v381 = vld [vmem:[#allocation7 + $0x68] sm:$0xff]
    %v382 = vld [vmem:[#allocation7 + $0x70] sm:$0xff]
    %v383 = vld [vmem:[#allocation7 + $0x78] sm:$0xff]
    %v384 = vld [vmem:[#allocation7 + $0x80] sm:$0xff]
    %v385 = vld [vmem:[#allocation7 + $0x88] sm:$0xff]
    %v386 = vld [vmem:[#allocation7 + $0x90] sm:$0xff]
    %v387 = vld [vmem:[#allocation7 + $0x98] sm:$0xff]
    %v388 = vld [vmem:[#allocation7 + $0xa0] sm:$0xff]
    %v389 = vld [vmem:[#allocation7 + $0xa8] sm:$0xff]
    %v390 = vld [vmem:[#allocation7 + $0xb0] sm:$0xff]
    %v391 = vld [vmem:[#allocation7 + $0xb8] sm:$0xff]
    %v392 = vld [vmem:[#allocation7 + $0xc0] sm:$0xff]
    %v393 = vld [vmem:[#allocation7 + $0xc8] sm:$0xff]
    %v394 = vld [vmem:[#allocation7 + $0xd0] sm:$0xff]
    %v395 = vld [vmem:[#allocation7 + $0xd8] sm:$0xff]
    %v396 = vld [vmem:[#allocation7 + $0xe0] sm:$0xff]
    %v397 = vld [vmem:[#allocation7 + $0xe8] sm:$0xff]
    %v398 = vld [vmem:[#allocation7 + $0xf0] sm:$0xff]
    %v399 = vld [vmem:[#allocation7 + $0xf8] sm:$0xff]
    %v400 = vld [vmem:[%s4] sm:$0x1]
    %v402 = vlaneseq
    %v403 = vshrl.u32 %v402, 7
    %v404 = vsub.s32 0, %v403
    %v405 = vrot.slane %v400, %v404
    %407 = vmatprep.subr.mxu0 0.0
    %408 = vmatpush1.msra.mxu0 %v383
    %409 = vmatprep.subr.mxu0 0.0
    %410 = vmatpush1.msra.mxu0 %v382
    %411 = vmatprep.subr.mxu0 0.0
    %412 = vmatpush1.msra.mxu0 %v381
    %413 = vmatprep.subr.mxu0 0.0
    %414 = vmatpush1.msra.mxu0 %v380
    %415 = vmatprep.subr.mxu0 0.0
    %416 = vmatpush1.msra.mxu0 %v379
    %417 = vmatprep.subr.mxu0 0.0
    %418 = vmatpush1.msra.mxu0 %v378
    %419 = vmatprep.subr.mxu0 0.0
    %420 = vmatpush1.msra.mxu0 %v377
    %421 = vmatprep.subr.mxu0 0.0
    %422 = vmatpush1.msra.mxu0 %v376
    %423 = vmatprep.subr.mxu0 0.0
    %424 = vmatpush1.msra.mxu0 %v375
    %425 = vmatprep.subr.mxu0 0.0
    %426 = vmatpush1.msra.mxu0 %v374
    %427 = vmatprep.subr.mxu0 0.0
    %428 = vmatpush1.msra.mxu0 %v373
    %429 = vmatprep.subr.mxu0 0.0
    %430 = vmatpush1.msra.mxu0 %v372
    %431 = vmatprep.subr.mxu0 0.0
    %432 = vmatpush1.msra.mxu0 %v371
    %433 = vmatprep.subr.mxu0 0.0
    %434 = vmatpush1.msra.mxu0 %v370
    %435 = vmatprep.subr.mxu0 0.0
    %436 = vmatpush1.msra.mxu0 %v369
    %437 = vmatprep.subr.mxu0 0.0
    %438 = vmatpush1.msra.mxu0 %v368
    %439 = vmatprep.subr.mxu0 0.0
    %440 = vmatpush2.msra.mxu0 %v399
    %441 = vmatprep.subr.mxu0 0.0
    %442 = vmatpush2.msra.mxu0 %v398
    %443 = vmatprep.subr.mxu0 0.0
    %444 = vmatpush2.msra.mxu0 %v397
    %445 = vmatprep.subr.mxu0 0.0
    %446 = vmatpush2.msra.mxu0 %v396
    %447 = vmatprep.subr.mxu0 0.0
    %448 = vmatpush2.msra.mxu0 %v395
    %449 = vmatprep.subr.mxu0 0.0
    %450 = vmatpush2.msra.mxu0 %v394
    %451 = vmatprep.subr.mxu0 0.0
    %452 = vmatpush2.msra.mxu0 %v393
    %453 = vmatprep.subr.mxu0 0.0
    %454 = vmatpush2.msra.mxu0 %v392
    %455 = vmatprep.subr.mxu0 0.0
    %456 = vmatpush2.msra.mxu0 %v391
    %457 = vmatprep.subr.mxu0 0.0
    %458 = vmatpush2.msra.mxu0 %v390
    %459 = vmatprep.subr.mxu0 0.0
    %460 = vmatpush2.msra.mxu0 %v389
    %461 = vmatprep.subr.mxu0 0.0
    %462 = vmatpush2.msra.mxu0 %v388
    %463 = vmatprep.subr.mxu0 0.0
    %464 = vmatpush2.msra.mxu0 %v387
    %465 = vmatprep.subr.mxu0 0.0
    %466 = vmatpush2.msra.mxu0 %v386
    %467 = vmatprep.subr.mxu0 0.0
    %468 = vmatpush2.msra.mxu0 %v385
    %469 = vmatprep.subr.mxu0 0.0
    %470 = vmatpush2.msra.mxu0 %v384
    %471 = vmatprep.mubr.f32.mxu0 %v367
    %472 = vmatmul.mubr.f32.gmra.mxu0 %v366
    %v473 = vpop.f32.mrf.mxu0
    %v474 = vadd.f32 %v405, %v473
    %v475 = vpop.f32.mrf.mxu0
    %476 = vdwg.mxu0
    %v477 = vmax.f32 %v474, 0.0
    %v478 = vld [vmem:[#allocation8] sm:$0xff]
    %v479 = vld [vmem:[#allocation8 + $0x8] sm:$0xff]
    %v480 = vld [vmem:[#allocation8 + $0x10] sm:$0xff]
    %v481 = vld [vmem:[#allocation8 + $0x18] sm:$0xff]
    %v482 = vld [vmem:[#allocation8 + $0x20] sm:$0xff]
    %v483 = vld [vmem:[#allocation8 + $0x28] sm:$0xff]
    %v484 = vld [vmem:[#allocation8 + $0x30] sm:$0xff]
    %v485 = vld [vmem:[#allocation8 + $0x38] sm:$0xff]
    %v486 = vld [vmem:[#allocation8 + $0x40] sm:$0xff]
    %v487 = vld [vmem:[#allocation8 + $0x48] sm:$0xff]
    %v488 = vld [vmem:[#allocation8 + $0x50] sm:$0xff]
    %v489 = vld [vmem:[#allocation8 + $0x58] sm:$0xff]
    %v490 = vld [vmem:[#allocation8 + $0x60] sm:$0xff]
    %v491 = vld [vmem:[#allocation8 + $0x68] sm:$0xff]
    %v492 = vld [vmem:[#allocation8 + $0x70] sm:$0xff]
    %v493 = vld [vmem:[#allocation8 + $0x78] sm:$0xff]
    %v494 = vld [vmem:[%s6] sm:$0x1]
    %v496 = vlaneseq
    %v497 = vshrl.u32 %v496, 7
    %v498 = vsub.s32 0, %v497
    %v499 = vrot.slane %v494, %v498
    %501 = vmatprep.subr.mxu0 0.0
    %502 = vmatpush1.msra.mxu0 %v493
    %503 = vmatprep.subr.mxu0 0.0
    %504 = vmatpush1.msra.mxu0 %v492
    %505 = vmatprep.subr.mxu0 0.0
    %506 = vmatpush1.msra.mxu0 %v491
    %507 = vmatprep.subr.mxu0 0.0
    %508 = vmatpush1.msra.mxu0 %v490
    %509 = vmatprep.subr.mxu0 0.0
    %510 = vmatpush1.msra.mxu0 %v489
    %511 = vmatprep.subr.mxu0 0.0
    %512 = vmatpush1.msra.mxu0 %v488
    %513 = vmatprep.subr.mxu0 0.0
    %514 = vmatpush1.msra.mxu0 %v487
    %515 = vmatprep.subr.mxu0 0.0
    %516 = vmatpush1.msra.mxu0 %v486
    %517 = vmatprep.subr.mxu0 0.0
    %518 = vmatpush1.msra.mxu0 %v485
    %519 = vmatprep.subr.mxu0 0.0
    %520 = vmatpush1.msra.mxu0 %v484
    %521 = vmatprep.subr.mxu0 0.0
    %522 = vmatpush1.msra.mxu0 %v483
    %523 = vmatprep.subr.mxu0 0.0
    %524 = vmatpush1.msra.mxu0 %v482
    %525 = vmatprep.subr.mxu0 0.0
    %526 = vmatpush1.msra.mxu0 %v481
    %527 = vmatprep.subr.mxu0 0.0
    %528 = vmatpush1.msra.mxu0 %v480
    %529 = vmatprep.subr.mxu0 0.0
    %530 = vmatpush1.msra.mxu0 %v479
    %531 = vmatprep.subr.mxu0 0.0
    %532 = vmatpush1.msra.mxu0 %v478
    %533 = vmatprep.subr.mxu0 0.0
    %534 = vmatpush2.msra.mxu0 0.0
    %535 = vmatprep.subr.mxu0 0.0
    %536 = vmatpush2.msra.mxu0 0.0
    %537 = vmatprep.subr.mxu0 0.0
    %538 = vmatpush2.msra.mxu0 0.0
    %539 = vmatprep.subr.mxu0 0.0
    %540 = vmatpush2.msra.mxu0 0.0
    %541 = vmatprep.subr.mxu0 0.0
    %542 = vmatpush2.msra.mxu0 0.0
    %543 = vmatprep.subr.mxu0 0.0
    %544 = vmatpush2.msra.mxu0 0.0
    %545 = vmatprep.subr.mxu0 0.0
    %546 = vmatpush2.msra.mxu0 0.0
    %547 = vmatprep.subr.mxu0 0.0
    %548 = vmatpush2.msra.mxu0 0.0
    %549 = vmatprep.subr.mxu0 0.0
    %550 = vmatpush2.msra.mxu0 0.0
    %551 = vmatprep.subr.mxu0 0.0
    %552 = vmatpush2.msra.mxu0 0.0
    %553 = vmatprep.subr.mxu0 0.0
    %554 = vmatpush2.msra.mxu0 0.0
    %555 = vmatprep.subr.mxu0 0.0
    %556 = vmatpush2.msra.mxu0 0.0
    %557 = vmatprep.subr.mxu0 0.0
    %558 = vmatpush2.msra.mxu0 0.0
    %559 = vmatprep.subr.mxu0 0.0
    %560 = vmatpush2.msra.mxu0 0.0
    %561 = vmatprep.subr.mxu0 0.0
    %562 = vmatpush2.msra.mxu0 0.0
    %563 = vmatprep.subr.mxu0 0.0
    %564 = vmatpush2.msra.mxu0 0.0
    %565 = vmatprep.mubr.f32.mxu0 0.0
    %566 = vmatmul.mubr.f32.gmra.mxu0 %v477
    %v567 = vpop.f32.mrf.mxu0
    %v568 = vadd.f32 %v499, %v567
    %v569 = vpop.f32.mrf.mxu0
    %570 = vdwg.mxu0
    %v571 = vmax.f32 %v568, 0.0
    %572 = vst [vmem:[#allocation10] sm:$0xff] %v571
    // Predicated region
    $region46: #{tpu_custom_call.1} parent=1 // pred_check
      _
    $region47: #{tpu_custom_call.1} parent=1 // pred_check_branch
      %574 = sbr.rel (0) target = $region49
    $region48: #{tpu_custom_call.1} parent=1 // pred_region
      %s576 = ssub.s32 128, 128
      %577 = vsyncadd [#allocation4], %s576
      %s579 = sshll.u32 [#allocation10], 4
      %s580 = int_to_ptr.vmem [resolvable:$true] %s579
      %582 = dma.vmem_to_hbm [thread:$0]  %s580, 128, %s7, [#allocation4]
    $region49: #{tpu_custom_call.1} parent=1 // pred_fallthru
      _
    // Predicated region
    $region50: #{tpu_custom_call.1} parent=1 // pred_check
      _
    $region51: #{tpu_custom_call.1} parent=1 // pred_check_branch
      %584 = sbr.rel (0) target = $region53
    $region52: #{tpu_custom_call.1} parent=1 // pred_region
      %585 = dma.done [#allocation4], 128
    $region53: #{tpu_custom_call.1} parent=1 // pred_fallthru
      _
    %586 = vsyncpa [#allocation3], 1
    %587 = vsyncpa [#allocation6], 1
    %588 = vsyncpa [#allocation9], 1
    %589 = vsyncpa [#allocation4], 1

</llo_original>
